<compile_context>
chip_gen: v7x
topology: tpu7x:2x2x1
jax: 0.10.0
libtpu: 0.0.40
codegen_flags: <defaults>
</compile_context>

<pallas_src>
import functools

import numpy as np

import jax
import jax.numpy as jnp
from jax.experimental import pallas as pl
from jax.experimental.pallas import tpu as pltpu

_ROW_CHUNK = 256          # in-kernel row sub-block (bounds f32 intermediates)


def _round_up(x, m):
    return ((x + m - 1) // m) * m


def _ffn_kernel(x_ref, w1_ref, b1_ref, w2_ref, b2_ref, o_ref, *, chunk, n_chunks):
    # x_ref: (tile_m, H) act dtype; w*_ref: (H, H) bf16; b*_ref: (1, H) f32;
    # o_ref: (tile_m, H) out dtype.
    def rows_body(start):
        rows = pl.ds(start, chunk)
        x = x_ref[rows, :]
        h = jnp.dot(x.astype(jnp.bfloat16), w1_ref[...],
                    preferred_element_type=jnp.float32) + b1_ref[...]
        h = jnp.maximum(h, 0.0)
        # TODO(synk): dropout1/dropout2 are identity in eval mode; training parity
        # would need pltpu.prng_seed / prng_random_bits masking here.
        y = jnp.dot(h.astype(jnp.bfloat16), w2_ref[...],
                    preferred_element_type=jnp.float32) + b2_ref[...]
        # Residual: re-read x right before the store to keep f32 live ranges short.
        o_ref[rows, :] = (y + x_ref[rows, :].astype(jnp.float32)).astype(o_ref.dtype)

    if n_chunks == 1:
        rows_body(0)
    else:
        @pl.loop(0, n_chunks)
        def _(c):
            rows_body(pl.multiple_of(c * chunk, chunk))


def pointwise_feedforward(x, w1, b1, w2, b2, *, tile_m=1024,
                          activation_dtype=jnp.bfloat16, vmem_limit_bytes=None):
    """x: (B, L, H).  w1, w2: (H_out, H_in) Conv1d weights (kernel dim squeezed).
    b1, b2: (H,).  Returns (B, L, H) in x.dtype."""
    B, L, H = x.shape
    M = B * L
    Hp = _round_up(H, 128)            # physical lane padding (VMEM accounting only)
    out_dtype = x.dtype
    act_dtype = np.dtype(x.dtype if activation_dtype is None else activation_dtype)
    act_bytes = act_dtype.itemsize
    out_bytes = np.dtype(out_dtype).itemsize
    # Sublane granule for the narrowest streamed dtype (f32: 8, bf16: 16, int8: 32).
    row_align = {4: 8, 2: 16, 1: 32}.get(min(act_bytes, out_bytes), 8)

    # ---- generation-aware VMEM budget (v5e/v6e 128 MiB, v7x 64 MiB) ----
    try:
        vmem_cap = int(pltpu.get_tpu_info().vmem_capacity_bytes)
    except Exception:
        vmem_cap = 64 << 20           # conservative fallback: v7x per-TC VMEM
    budget = (vmem_cap * 3) // 4

    def _vmem_usage(tm):
        w = 2 * 2 * Hp * Hp * 2                      # 2 weights, DOUBLE-buffered, bf16
        bias = 2 * 2 * 8 * 128 * 4                   # (1, H) f32 tiles padded to (8, 128)
        xt = 2 * tm * Hp * act_bytes                 # double-buffered x tile
        ot = 2 * tm * Hp * out_bytes                 # double-buffered out tile
        inter = 4 * min(tm, _ROW_CHUNK) * Hp * 4     # f32 h / y / residual temporaries
        return w + bias + xt + ot + inter

    # ---- tile_m: largest tile fitting the budget; >=2 grid blocks for megacore ----
    tile_m = max(row_align, _round_up(int(tile_m), row_align))
    tile_m = min(tile_m, _round_up(M, row_align))
    if tile_m >= M and M > row_align:                # keep both v7x TensorCores busy
        tile_m = _round_up((M + 1) // 2, row_align)
    while tile_m > row_align and _vmem_usage(tile_m) > budget:
        tile_m = max(row_align, _round_up(tile_m // 2, row_align))
    if tile_m > _ROW_CHUNK:                          # align big tiles to the row chunk
        tile_m = (tile_m // _ROW_CHUNK) * _ROW_CHUNK
        chunk = _ROW_CHUNK
    else:
        chunk = tile_m
    n_chunks = tile_m // chunk
    grid_m = pl.cdiv(M, tile_m)

    if vmem_limit_bytes is None:
        vmem_limit_bytes = min(int(vmem_cap * 0.9),
                               max(_vmem_usage(tile_m) + (8 << 20), 32 << 20))

    # No host-side padding: the reshape is free; weight/bias casts are tiny one-offs.
    x2d = x.reshape(M, H).astype(act_dtype)
    w1t = w1.T.astype(jnp.bfloat16)                  # (H_in, H_out)
    w2t = w2.T.astype(jnp.bfloat16)
    b1r = b1.astype(jnp.float32).reshape(1, H)
    b2r = b2.astype(jnp.float32).reshape(1, H)

    cost = pl.CostEstimate(
        flops=4 * M * H * H,                         # two (M,H)x(H,H) matmuls
        transcendentals=0,
        bytes_accessed=M * H * (act_bytes + out_bytes) + 2 * H * H * 2 + 2 * H * 4,
    )

    kernel = functools.partial(_ffn_kernel, chunk=chunk, n_chunks=n_chunks)

    out2d = pl.pallas_call(
        kernel,
        out_shape=jax.ShapeDtypeStruct((M, H), out_dtype),
        grid=(grid_m,),
        in_specs=[
            # x tile streams; pipeline depth (pl.Buffered) could be swept if DMA exposed.
            pl.BlockSpec((tile_m, H), lambda i: (i, 0)),
            pl.BlockSpec((H, H), lambda i: (0, 0)),        # W1^T (resident)
            pl.BlockSpec((1, H), lambda i: (0, 0)),        # b1
            pl.BlockSpec((H, H), lambda i: (0, 0)),        # W2^T (resident)
            pl.BlockSpec((1, H), lambda i: (0, 0)),        # b2
        ],
        out_specs=pl.BlockSpec((tile_m, H), lambda i: (i, 0)),
        compiler_params=pltpu.CompilerParams(
            dimension_semantics=("parallel",),             # shard M across v7x TCs
            vmem_limit_bytes=int(vmem_limit_bytes),
        ),
        cost_estimate=cost,
    )(x2d, w1t, b1r, w2t, b2r)

    # TODO(synk): for very large H whose (H,H) weights cannot stay resident in VMEM
    # (v7x 64 MiB), fall back to an N/K-tiled grid instead of shrinking tile_m.
    return out2d.reshape(B, L, H)


def _torch_like_conv1d_init(key, h):
    """Deterministic init mimicking torch.nn.Conv1d(h, h, 1) default:
    U(-1/sqrt(fan_in), 1/sqrt(fan_in)) for both weight and bias."""
    kw, kb = jax.random.split(key)
    bound = 1.0 / jnp.sqrt(jnp.float32(h))
    w = jax.random.uniform(kw, (h, h), jnp.float32, -bound, bound)   # (out, in)
    b = jax.random.uniform(kb, (h,), jnp.float32, -bound, bound)
    return w, b


def reference_ffn(x, w1, b1, w2, b2):
    # Pure-JAX f32 reference of the PyTorch forward (dropout = identity).
    h = jnp.maximum(jnp.einsum("blh,oh->blo", x, w1) + b1, 0.0)
    y = jnp.einsum("blh,oh->blo", h, w2) + b2
    return y + x


if __name__ == "__main__":
    key = jax.random.PRNGKey(0)

    # Small shape (batch=2, seq=8, hidden=32): single-block fast path.
    # Larger shape: exercises the multi-block grid and the in-kernel row-chunk loop.
    for (B, L, H) in [(2, 8, 32), (8, 512, 64)]:
        kx, k1, k2, key = jax.random.split(key, 4)
        x = jax.random.normal(kx, (B, L, H), jnp.float32)
        w1, b1 = _torch_like_conv1d_init(k1, H)
        w2, b2 = _torch_like_conv1d_init(k2, H)

        out = jax.block_until_ready(pointwise_feedforward(x, w1, b1, w2, b2))
        ref = reference_ffn(x, w1, b1, w2, b2)
        assert out.shape == (B, L, H)
        # bf16 streamed activations + bf16 matmul operands (f32 accumulate)
        # => looser tolerance than pure f32.
        assert jnp.allclose(out, ref, atol=5e-2, rtol=5e-2), f"mismatch at {(B, L, H)}"

    print("KERNEL_OK")
</pallas_src>

<mosaic_0001>
module attributes {stable_mosaic.version = 11 : i64} {
  func.func @_ffn_kernel(%arg0: i32, %arg1: memref<16x32xbf16, #tpu.memory_space<vmem>>, %arg2: memref<32x32xbf16, #tpu.memory_space<vmem>>, %arg3: memref<1x32xf32, #tpu.memory_space<vmem>>, %arg4: memref<32x32xbf16, #tpu.memory_space<vmem>>, %arg5: memref<1x32xf32, #tpu.memory_space<vmem>>, %arg6: memref<16x32xf32, #tpu.memory_space<vmem>>) attributes {dimension_semantics = [#tpu.dimension_semantics<parallel>], iteration_bounds = array<i64: 1>, scalar_prefetch = 0 : i64, scratch_operands = 0 : i64, tpu.core_type = #tpu.core_type<tc>, window_params = [{transform_indices = @transform_0, window_bounds = array<i64: 16, 32>}, {pipeline_mode = #tpu.pipeline_mode<synchronous>, transform_indices = @transform_1, window_bounds = array<i64: 32, 32>}, {pipeline_mode = #tpu.pipeline_mode<synchronous>, transform_indices = @transform_2, window_bounds = array<i64: 1, 32>}, {pipeline_mode = #tpu.pipeline_mode<synchronous>, transform_indices = @transform_3, window_bounds = array<i64: 32, 32>}, {pipeline_mode = #tpu.pipeline_mode<synchronous>, transform_indices = @transform_4, window_bounds = array<i64: 1, 32>}, {transform_indices = @transform_5, window_bounds = array<i64: 16, 32>}]} {
    %c0 = arith.constant 0 : index
    %c0_0 = arith.constant 0 : index
    %0 = vector.load %arg1[%c0, %c0_0] : memref<16x32xbf16, #tpu.memory_space<vmem>>, vector<16x32xbf16>
    %c0_1 = arith.constant 0 : index
    %c0_2 = arith.constant 0 : index
    %1 = vector.load %arg2[%c0_1, %c0_2] : memref<32x32xbf16, #tpu.memory_space<vmem>>, vector<32x32xbf16>
    %cst = arith.constant dense<0.000000e+00> : vector<16x32xf32>
    %2 = tpu.matmul %0, %1, %cst {dimension_numbers = #tpu.dot_dimension_numbers<[1], [0], [0], [1], [0, 0, 1, 1], [], []>} : vector<16x32xbf16>, vector<32x32xbf16>, vector<16x32xf32> -> vector<16x32xf32>
    %c0_3 = arith.constant 0 : index
    %c0_4 = arith.constant 0 : index
    %3 = vector.load %arg3[%c0_3, %c0_4] : memref<1x32xf32, #tpu.memory_space<vmem>>, vector<1x32xf32>
    %4 = vector.broadcast %3 : vector<1x32xf32> to vector<16x32xf32>
    %5 = arith.addf %2, %4 : vector<16x32xf32>
    %cst_5 = arith.constant 0.000000e+00 : f32
    %6 = vector.broadcast %cst_5 : f32 to vector<16x32xf32>
    %7 = arith.maximumf %5, %6 : vector<16x32xf32>
    %8 = arith.truncf %7 : vector<16x32xf32> to vector<16x32xbf16>
    %c0_6 = arith.constant 0 : index
    %c0_7 = arith.constant 0 : index
    %9 = vector.load %arg4[%c0_6, %c0_7] : memref<32x32xbf16, #tpu.memory_space<vmem>>, vector<32x32xbf16>
    %cst_8 = arith.constant dense<0.000000e+00> : vector<16x32xf32>
    %10 = tpu.matmul %8, %9, %cst_8 {dimension_numbers = #tpu.dot_dimension_numbers<[1], [0], [0], [1], [0, 0, 1, 1], [], []>} : vector<16x32xbf16>, vector<32x32xbf16>, vector<16x32xf32> -> vector<16x32xf32>
    %c0_9 = arith.constant 0 : index
    %c0_10 = arith.constant 0 : index
    %11 = vector.load %arg5[%c0_9, %c0_10] : memref<1x32xf32, #tpu.memory_space<vmem>>, vector<1x32xf32>
    %12 = vector.broadcast %11 : vector<1x32xf32> to vector<16x32xf32>
    %13 = arith.addf %10, %12 : vector<16x32xf32>
    %c0_11 = arith.constant 0 : index
    %c0_12 = arith.constant 0 : index
    %14 = vector.load %arg1[%c0_11, %c0_12] : memref<16x32xbf16, #tpu.memory_space<vmem>>, vector<16x32xbf16>
    %15 = arith.extf %14 : vector<16x32xbf16> to vector<16x32xf32>
    %16 = arith.addf %13, %15 : vector<16x32xf32>
    %c0_13 = arith.constant 0 : index
    %c0_14 = arith.constant 0 : index
    %17 = vector.load %arg6[%c0_13, %c0_14] : memref<16x32xf32, #tpu.memory_space<vmem>>, vector<16x32xf32>
    tpu.vector_store %arg6[%c0_13, %c0_14], %16 {strides = array<i32>} : memref<16x32xf32, #tpu.memory_space<vmem>>, vector<16x32xf32>,
    return
  }
  func.func @transform_0(%arg0: i32) -> (i32, i32) {
    %c0_i32 = arith.constant 0 : i32
    %c0_i32_0 = arith.constant 0 : i32
    return %arg0, %c0_i32 : i32, i32
  }
  func.func @transform_1(%arg0: i32) -> (i32, i32) {
    %c0_i32 = arith.constant 0 : i32
    %c0_i32_0 = arith.constant 0 : i32
    %c0_i32_1 = arith.constant 0 : i32
    return %c0_i32, %c0_i32_0 : i32, i32
  }
  func.func @transform_2(%arg0: i32) -> (i32, i32) {
    %c0_i32 = arith.constant 0 : i32
    %c0_i32_0 = arith.constant 0 : i32
    %c0_i32_1 = arith.constant 0 : i32
    return %c0_i32, %c0_i32_0 : i32, i32
  }
  func.func @transform_3(%arg0: i32) -> (i32, i32) {
    %c0_i32 = arith.constant 0 : i32
    %c0_i32_0 = arith.constant 0 : i32
    %c0_i32_1 = arith.constant 0 : i32
    return %c0_i32, %c0_i32_0 : i32, i32
  }
  func.func @transform_4(%arg0: i32) -> (i32, i32) {
    %c0_i32 = arith.constant 0 : i32
    %c0_i32_0 = arith.constant 0 : i32
    %c0_i32_1 = arith.constant 0 : i32
    return %c0_i32, %c0_i32_0 : i32, i32
  }
  func.func @transform_5(%arg0: i32) -> (i32, i32) {
    %c0_i32 = arith.constant 0 : i32
    %c0_i32_0 = arith.constant 0 : i32
    return %arg0, %c0_i32 : i32, i32
  }
}

</mosaic_0001>

<llo_original>
// kernel: tpu_custom_call.1
$region0: #{tpu_custom_call.1}
  #allocation0 [shape = 'u32[]', space=smem, size = 0x4, offset = 0x4, fixed_abs, tag = 'smem constant byte address 0x4 - core index']
  #allocation1 [shape = 'u32[144,128]{1,0:T(1,128)}', space=vmem, size = 0x12000, scoped, tag = 'internal scratch']
  %s0 = inlined_call_operand.hbm [shape: bf16[16,32], index: 0, kind: input, shape index: {}]
  %s1 = inlined_call_operand.hbm [shape: bf16[32,32], index: 1, kind: input, shape index: {}]
  %s2 = inlined_call_operand.vmem [shape: f32[1,32], index: 2, kind: input, shape index: {}]
  %s3 = inlined_call_operand.hbm [shape: bf16[32,32], index: 3, kind: input, shape index: {}]
  %s4 = inlined_call_operand.vmem [shape: f32[1,32], index: 4, kind: input, shape index: {}]
  %s5 = inlined_call_operand.hbm [shape: f32[16,32], index: 5, kind: output, shape index: {}]
  %s6 = sld [smem:[#allocation0]]
  $region42: #{tpu_custom_call.1} parent=0
    _
  %s8 = ssub.s32 1, %s6
  %s9 = scalar_select 0, %s8, %s6
  $region1: #{tpu_custom_call.1} parent=0
    #allocation2 [shape = 'u8[4096]{0}', space=vmem, size = 0x1000, scoped, tag = 'input window, operand 0, single buffered']
    #allocation3 [shape = 's32[1]{0}', space=sflag, size = 0x4, scoped, tag = 'scoped memory for tpu_custom_call.1']
    #allocation4 [shape = 's32[1]{0}', space=sflag, size = 0x4, scoped, tag = 'scoped memory for tpu_custom_call.1']
    #allocation5 [shape = 'u8[8192]{0}', space=vmem, size = 0x2000, scoped, tag = 'input window, operand 1, single buffered']
    #allocation6 [shape = 's32[1]{0}', space=sflag, size = 0x4, scoped, tag = 'scoped memory for tpu_custom_call.1']
    #allocation7 [shape = 'u8[8192]{0}', space=vmem, size = 0x2000, scoped, tag = 'input window, operand 3, single buffered']
    #allocation8 [shape = 'u8[8192]{0}', space=vmem, size = 0x2000, scoped, tag = 'output window, operand 0, single buffered']
    %10 = vsyncpa [#allocation3], 0
    %11 = vsyncpa [#allocation6], 0
    %12 = vsyncpa [#allocation4], 0
    // Predicated region
    $region2: #{tpu_custom_call.1} parent=1 // pred_check
      _
    $region3: #{tpu_custom_call.1} parent=1 // pred_check_branch
      %14 = sbr.rel (0) target = $region5
    $region4: #{tpu_custom_call.1} parent=1 // pred_region
      %s16 = ssub.s32 128, 128
      %17 = vsyncadd [#allocation3], %s16
      %s18 = sshll.u32 [#allocation2], 4
      %s19 = int_to_ptr.vmem [resolvable:$true] %s18
      %24 = dma.hbm_to_vmem [thread:$0]  %s0, 128, %s19, [#allocation3], 64, 64, 4
    $region5: #{tpu_custom_call.1} parent=1 // pred_fallthru
      _
    // Predicated region
    $region6: #{tpu_custom_call.1} parent=1 // pred_check
      _
    $region7: #{tpu_custom_call.1} parent=1 // pred_check_branch
      %26 = sbr.rel (0) target = $region9
    $region8: #{tpu_custom_call.1} parent=1 // pred_region
      %s28 = ssub.s32 256, 256
      %29 = vsyncadd [#allocation6], %s28
      %s30 = sshll.u32 [#allocation5], 4
      %s31 = int_to_ptr.vmem [resolvable:$true] %s30
      %36 = dma.hbm_to_vmem [thread:$0]  %s1, 256, %s31, [#allocation6], 64, 64, 4
    $region9: #{tpu_custom_call.1} parent=1 // pred_fallthru
      _
    // Predicated region
    $region10: #{tpu_custom_call.1} parent=1 // pred_check
      _
    $region11: #{tpu_custom_call.1} parent=1 // pred_check_branch
      %38 = sbr.rel (0) target = $region13
    $region12: #{tpu_custom_call.1} parent=1 // pred_region
      _
    $region13: #{tpu_custom_call.1} parent=1 // pred_fallthru
      _
    // Predicated region
    $region14: #{tpu_custom_call.1} parent=1 // pred_check
      _
    $region15: #{tpu_custom_call.1} parent=1 // pred_check_branch
      %40 = sbr.rel (0) target = $region17
    $region16: #{tpu_custom_call.1} parent=1 // pred_region
      %s42 = ssub.s32 256, 256
      %43 = vsyncadd [#allocation6], %s42
      %s44 = sshll.u32 [#allocation7], 4
      %s45 = int_to_ptr.vmem [resolvable:$true] %s44
      %50 = dma.hbm_to_vmem [thread:$0]  %s3, 256, %s45, [#allocation6], 64, 64, 4
    $region17: #{tpu_custom_call.1} parent=1 // pred_fallthru
      _
    // Predicated region
    $region18: #{tpu_custom_call.1} parent=1 // pred_check
      _
    $region19: #{tpu_custom_call.1} parent=1 // pred_check_branch
      %52 = sbr.rel (0) target = $region21
    $region20: #{tpu_custom_call.1} parent=1 // pred_region
      _
    $region21: #{tpu_custom_call.1} parent=1 // pred_fallthru
      _
    // Predicated region
    $region22: #{tpu_custom_call.1} parent=1 // pred_check
      _
    $region23: #{tpu_custom_call.1} parent=1 // pred_check_branch
      %54 = sbr.rel (0) target = $region25
    $region24: #{tpu_custom_call.1} parent=1 // pred_region
      %55 = dma.done [#allocation3], 128
    $region25: #{tpu_custom_call.1} parent=1 // pred_fallthru
      _
    // Predicated region
    $region26: #{tpu_custom_call.1} parent=1 // pred_check
      _
    $region27: #{tpu_custom_call.1} parent=1 // pred_check_branch
      %57 = sbr.rel (0) target = $region29
    $region28: #{tpu_custom_call.1} parent=1 // pred_region
      %58 = dma.done [#allocation6], 256
    $region29: #{tpu_custom_call.1} parent=1 // pred_fallthru
      _
    // Predicated region
    $region30: #{tpu_custom_call.1} parent=1 // pred_check
      _
    $region31: #{tpu_custom_call.1} parent=1 // pred_check_branch
      %60 = sbr.rel (0) target = $region33
    $region32: #{tpu_custom_call.1} parent=1 // pred_region
      %61 = dma.done [#allocation6], 256
    $region33: #{tpu_custom_call.1} parent=1 // pred_fallthru
      _
    %v63 = vld [vmem:[#allocation2] sm:$0xf]
    %v64 = vld [vmem:[#allocation2 + $0x4] sm:$0xf]
    %v65 = vld [vmem:[#allocation5] sm:$0xf]
    %v66 = vld [vmem:[#allocation5 + $0x4] sm:$0xf]
    %v67 = vld [vmem:[#allocation5 + $0x8] sm:$0xf]
    %v68 = vld [vmem:[#allocation5 + $0xc] sm:$0xf]
    %v69 = vld [vmem:[%s2] sm:$0x1]
    %v71 = vlaneseq
    %v72 = vshrl.u32 %v71, 7
    %v73 = vsub.s32 0, %v72
    %v74 = vrot.slane %v69, %v73
    %v78 = vunpack.c.l.b16 %v63
    %v79 = vunpack.c.l.b16 %v64
    %v80 = vpack.c.b16 %v79, %v78
    %v85 = vunpack.c.l.b16 %v65
    %v86 = vunpack.c.l.b16 %v66
    %v87 = vunpack.c.l.b16 %v67
    %v88 = vunpack.c.l.b16 %v68
    %v89 = vpack.c.b16 %v86, %v85
    %v90 = vpack.c.b16 %v88, %v87
    %vm93 = vcmask 261120
    %v95 = vsel %vm93, %v80, 0
    %97 = vmatprep.subr.bf16.mxu0 0
    %98 = vmatpush1.bf16.msra.mxu0 %v89
    %99 = vmatprep.subr.bf16.mxu0 0
    %100 = vmatpush1.bf16.msra.mxu0 %v90
    %101 = vmatprep.subr.bf16.mxu0 0
    %102 = vmatpush1.bf16.msra.mxu0 0
    %103 = vmatprep.subr.bf16.mxu0 0
    %104 = vmatpush1.bf16.msra.mxu0 0
    %105 = vmatprep.subr.bf16.mxu0 0
    %106 = vmatpush1.bf16.msra.mxu0 0
    %107 = vmatprep.subr.bf16.mxu0 0
    %108 = vmatpush1.bf16.msra.mxu0 0
    %109 = vmatprep.subr.bf16.mxu0 0
    %110 = vmatpush1.bf16.msra.mxu0 0
    %111 = vmatprep.subr.bf16.mxu0 0
    %112 = vmatpush1.bf16.msra.mxu0 0
    %113 = vmatprep.subr.bf16.mxu0 0
    %114 = vmatpush1.bf16.msra.mxu0 0
    %115 = vmatprep.subr.bf16.mxu0 0
    %116 = vmatpush1.bf16.msra.mxu0 0
    %117 = vmatprep.subr.bf16.mxu0 0
    %118 = vmatpush1.bf16.msra.mxu0 0
    %119 = vmatprep.subr.bf16.mxu0 0
    %120 = vmatpush1.bf16.msra.mxu0 0
    %121 = vmatprep.subr.bf16.mxu0 0
    %122 = vmatpush1.bf16.msra.mxu0 0
    %123 = vmatprep.subr.bf16.mxu0 0
    %124 = vmatpush1.bf16.msra.mxu0 0
    %125 = vmatprep.subr.bf16.mxu0 0
    %126 = vmatpush1.bf16.msra.mxu0 0
    %127 = vmatprep.subr.bf16.mxu0 0
    %128 = vmatpush1.bf16.msra.mxu0 0
    %129 = vmatprep.mubr.bf16.mxu0 0
    %130 = vmatmul.mubr.bf16.gmra.mrb[0].mxu0 %v95
    %v131 = vpop.f32.mrb[0].mxu0
    %v132 = vadd.f32 %v74, %v131
    %v133 = vpop.f32.mrb[0].mxu0
    %v134 = vpop.f32.mrb[0].mxu0
    %v135 = vadd.f32 %v74, %v134
    %v136 = vpop.f32.mrb[0].mxu0
    %137 = vdwg.mxu0
    %v138 = vmax.f32 %v132, 0.0
    %v139 = vmax.f32 %v135, 0.0
    %v140 = vpack.c.bf16 %v139, %v138
    %v141 = vld [vmem:[#allocation7] sm:$0xf]
    %v142 = vld [vmem:[#allocation7 + $0x4] sm:$0xf]
    %v143 = vld [vmem:[#allocation7 + $0x8] sm:$0xf]
    %v144 = vld [vmem:[#allocation7 + $0xc] sm:$0xf]
    %v145 = vld [vmem:[%s4] sm:$0x1]
    %v147 = vlaneseq
    %v148 = vshrl.u32 %v147, 7
    %v149 = vsub.s32 0, %v148
    %v150 = vrot.slane %v145, %v149
    %v156 = vunpack.c.l.b16 %v141
    %v157 = vunpack.c.l.b16 %v142
    %v158 = vunpack.c.l.b16 %v143
    %v159 = vunpack.c.l.b16 %v144
    %v160 = vpack.c.b16 %v157, %v156
    %v161 = vpack.c.b16 %v159, %v158
    %v165 = vsel %vm93, %v140, 0
    %167 = vmatprep.subr.bf16.mxu0 0
    %168 = vmatpush1.bf16.msra.mxu0 %v160
    %169 = vmatprep.subr.bf16.mxu0 0
    %170 = vmatpush1.bf16.msra.mxu0 %v161
    %171 = vmatprep.subr.bf16.mxu0 0
    %172 = vmatpush1.bf16.msra.mxu0 0
    %173 = vmatprep.subr.bf16.mxu0 0
    %174 = vmatpush1.bf16.msra.mxu0 0
    %175 = vmatprep.subr.bf16.mxu0 0
    %176 = vmatpush1.bf16.msra.mxu0 0
    %177 = vmatprep.subr.bf16.mxu0 0
    %178 = vmatpush1.bf16.msra.mxu0 0
    %179 = vmatprep.subr.bf16.mxu0 0
    %180 = vmatpush1.bf16.msra.mxu0 0
    %181 = vmatprep.subr.bf16.mxu0 0
    %182 = vmatpush1.bf16.msra.mxu0 0
    %183 = vmatprep.subr.bf16.mxu0 0
    %184 = vmatpush1.bf16.msra.mxu0 0
    %185 = vmatprep.subr.bf16.mxu0 0
    %186 = vmatpush1.bf16.msra.mxu0 0
    %187 = vmatprep.subr.bf16.mxu0 0
    %188 = vmatpush1.bf16.msra.mxu0 0
    %189 = vmatprep.subr.bf16.mxu0 0
    %190 = vmatpush1.bf16.msra.mxu0 0
    %191 = vmatprep.subr.bf16.mxu0 0
    %192 = vmatpush1.bf16.msra.mxu0 0
    %193 = vmatprep.subr.bf16.mxu0 0
    %194 = vmatpush1.bf16.msra.mxu0 0
    %195 = vmatprep.subr.bf16.mxu0 0
    %196 = vmatpush1.bf16.msra.mxu0 0
    %197 = vmatprep.subr.bf16.mxu0 0
    %198 = vmatpush1.bf16.msra.mxu0 0
    %199 = vmatprep.mubr.bf16.mxu0 0
    %200 = vmatmul.mubr.bf16.gmra.mrb[0].mxu0 %v165
    %v201 = vpop.f32.mrb[0].mxu0
    %v202 = vadd.f32 %v150, %v201
    %v203 = vpop.f32.mrb[0].mxu0
    %v204 = vpop.f32.mrb[0].mxu0
    %v205 = vadd.f32 %v150, %v204
    %v206 = vpop.f32.mrb[0].mxu0
    %207 = vdwg.mxu0
    %v208 = vunpack.c.l.bf16 %v63
    %v209 = vunpack.c.l.bf16 %v64
    %v210 = vadd.f32 %v202, %v208
    %v211 = vadd.f32 %v205, %v209
    %212 = vst.msk [vmem:[#allocation8] sm:$0xff] %vm93, %v210
    %213 = vst.msk [vmem:[#allocation8 + $0x8] sm:$0xff] %vm93, %v211
    // Predicated region
    $region34: #{tpu_custom_call.1} parent=1 // pred_check
      _
    $region35: #{tpu_custom_call.1} parent=1 // pred_check_branch
      %215 = sbr.rel (0) target = $region37
    $region36: #{tpu_custom_call.1} parent=1 // pred_region
      %s217 = ssub.s32 256, 256
      %218 = vsyncadd [#allocation4], %s217
      %s219 = sshll.u32 [#allocation8], 4
      %s220 = int_to_ptr.vmem [resolvable:$true] %s219
      %225 = dma.vmem_to_hbm [thread:$0]  %s220, 256, %s5, [#allocation4], 128, 128, 8
    $region37: #{tpu_custom_call.1} parent=1 // pred_fallthru
      _
    // Predicated region
    $region38: #{tpu_custom_call.1} parent=1 // pred_check
      _
    $region39: #{tpu_custom_call.1} parent=1 // pred_check_branch
      %227 = sbr.rel (0) target = $region41
    $region40: #{tpu_custom_call.1} parent=1 // pred_region
      %228 = dma.done [#allocation4], 256
    $region41: #{tpu_custom_call.1} parent=1 // pred_fallthru
      _
    %229 = vsyncpa [#allocation3], 1
    %230 = vsyncpa [#allocation6], 1
    %231 = vsyncpa [#allocation4], 1

</llo_original>
